<compile_context>
chip_gen: v6e
topology: v6e:2x2x1
jax: 0.10.0
libtpu: 0.0.40
codegen_flags: <defaults>
</compile_context>

<pallas_src>
import jax
import jax.numpy as jnp
from jax.experimental import pallas as pl
from jax.experimental.pallas import tpu as pltpu

LANE = 128
BF16_ROWS = 16  # bf16 packs 16 rows per vreg sublane group


def _round_up(n, m):
    return ((n + m - 1) // m) * m


def _pad_axis(a, axis, new_size):
    pad = new_size - a.shape[axis]
    if pad == 0:
        return a
    widths = [(0, 0)] * a.ndim
    widths[axis] = (0, pad)
    return jnp.pad(a, widths)


def mlp_kernel(x_ref, w1_ref, b1_ref, w2_ref, b2_ref, w3_ref, b3_ref, o_ref):
    # In-kernel cast of the f32 input tile to bf16 (hides under the MXU).
    xb = x_ref[...].astype(w1_ref.dtype)

    # Layer 1: Linear(d_in -> H) + ReLU   (Dropout = identity in eval mode)
    h1 = jnp.dot(xb, w1_ref[...], preferred_element_type=jnp.float32)
    h1 = jnp.maximum(h1 + b1_ref[...], 0.0).astype(w2_ref.dtype)  # f32 math, bf16 live

    # Layer 2: Linear(H -> H2, lane-padded) + ReLU
    h2 = jnp.dot(h1, w2_ref[...], preferred_element_type=jnp.float32)
    h2 = jnp.maximum(h2 + b2_ref[...], 0.0).astype(w3_ref.dtype)

    # Layer 3: Linear(H2 -> out_dim) -- true out_dim columns, no lane padding.
    out = jnp.dot(h2, w3_ref[...], preferred_element_type=jnp.float32)
    o_ref[...] = (out + b3_ref[...]).astype(o_ref.dtype)


def prepare_params(params, compute_dtype=jnp.bfloat16):
    """One-time weight prep: lane-pad hidden2, cast weights to bf16, biases to f32.

    params: dict with w1 (D_in,H), b1 (1,H), w2 (H,H2), b2 (1,H2),
            w3 (H2,D_out), b3 (1,D_out) -- i.e. transposed nn.Linear weights.
    """
    w1, b1 = params["w1"], params["b1"]
    w2, b2 = params["w2"], params["b2"]
    w3, b3 = params["w3"], params["b3"]

    h2_dim = w2.shape[1]
    h2_pad = _round_up(h2_dim, LANE)

    # Zero-pad hidden2 columns (and the matching w3 rows) -> results unchanged
    # (padded h2 columns are exactly 0 after ReLU, padded w3 rows are 0).
    w2p = _pad_axis(w2, 1, h2_pad)
    b2p = _pad_axis(b2, 1, h2_pad)
    w3p = _pad_axis(w3, 0, h2_pad)

    return {
        "w1": w1.astype(compute_dtype),
        "b1": b1.astype(jnp.float32),
        "w2": w2p.astype(compute_dtype),
        "b2": b2p.astype(jnp.float32),
        "w3": w3p.astype(compute_dtype),
        "b3": b3.astype(jnp.float32),
    }


def exact_dimension_network_forward(x, prepared, *, block_batch=1024):
    """Fused eval-mode forward pass of ExactDimensionNetwork.

    x: (batch, input_dim) float32 (1-D input is promoted to (1, input_dim)).
    prepared: output of prepare_params().
    """
    if x.ndim == 1:
        x = x[None, :]
    x = x.astype(jnp.float32)

    w1, b1 = prepared["w1"], prepared["b1"]
    w2, b2 = prepared["w2"], prepared["b2"]
    w3, b3 = prepared["w3"], prepared["b3"]

    d_in = w1.shape[0]
    if x.shape[-1] != d_in:
        raise ValueError(
            f"Input dimension mismatch: expected {d_in}, got {x.shape[-1]}")

    hidden = w1.shape[1]
    h2_pad = w2.shape[1]
    out_dim = w3.shape[1]

    # ---- Batch tiling: large tiles amortize the ~0.35us/step grid overhead;
    #      keep >= 2 grid steps when the batch allows (v7x megacore + pipelining).
    B = x.shape[0]
    bt = min(block_batch, _round_up(B, BF16_ROWS))
    bt = _round_up(bt, BF16_ROWS)
    if B > BF16_ROWS and _round_up(B, bt) // bt < 2:
        bt = _round_up((B + 1) // 2, BF16_ROWS)
    b_pad = _round_up(B, bt)
    xp = _pad_axis(x, 0, b_pad)
    grid = (b_pad // bt,)

    const = lambda a: pl.BlockSpec(a.shape, lambda i: (0,) * a.ndim)

    flops = 2 * b_pad * (d_in * hidden + hidden * h2_pad + h2_pad * out_dim)
    bytes_accessed = (
        xp.size * 4
        + w1.size * 2 + w2.size * 2 + w3.size * 2
        + b1.size * 4 + b2.size * 4 + b3.size * 4
        + b_pad * out_dim * 4)

    out = pl.pallas_call(
        mlp_kernel,
        out_shape=jax.ShapeDtypeStruct((b_pad, out_dim), jnp.float32),
        grid=grid,
        in_specs=[
            pl.BlockSpec((bt, d_in), lambda i: (i, 0)),   # x tile (pipelined)
            const(w1), const(b1),                          # weights stay resident
            const(w2), const(b2),
            const(w3), const(b3),
        ],
        out_specs=pl.BlockSpec((bt, out_dim), lambda i: (i, 0)),
        compiler_params=pltpu.CompilerParams(
            dimension_semantics=("parallel",),
            vmem_limit_bytes=32 * 1024 * 1024),
        cost_estimate=pl.CostEstimate(
            flops=flops, transcendentals=0, bytes_accessed=bytes_accessed),
    )(xp, w1, b1, w2, b2, w3, b3)

    # Slice off batch padding only (no lane padding on the output).
    return out if b_pad == B else out[:B]


def xavier_uniform(key, fan_in, fan_out):
    # torch.nn.init.xavier_uniform_: U(-a, a), a = sqrt(6 / (fan_in + fan_out))
    limit = jnp.sqrt(6.0 / (fan_in + fan_out))
    return jax.random.uniform(
        key, (fan_in, fan_out), dtype=jnp.float32, minval=-limit, maxval=limit)


def init_params(key, input_dim, output_dim, hidden_dim=128):
    k1, k2, k3 = jax.random.split(key, 3)
    h2 = hidden_dim // 2
    return {
        "w1": xavier_uniform(k1, input_dim, hidden_dim),
        "b1": jnp.zeros((1, hidden_dim), jnp.float32),
        "w2": xavier_uniform(k2, hidden_dim, h2),
        "b2": jnp.zeros((1, h2), jnp.float32),
        "w3": xavier_uniform(k3, h2, output_dim),
        "b3": jnp.zeros((1, output_dim), jnp.float32),
    }


if __name__ == "__main__":
    input_dim, output_dim, hidden_dim = 16, 8, 128
    batch = 8

    key = jax.random.PRNGKey(0)
    kx, kp = jax.random.split(key)
    x = jax.random.normal(kx, (batch, input_dim), dtype=jnp.float32)
    params = init_params(kp, input_dim, output_dim, hidden_dim)
    prepared = prepare_params(params)

    out = exact_dimension_network_forward(x, prepared)
    out = jax.block_until_ready(out)

    # Pure-JAX reference with the same bf16-in / f32-accumulate recipe.
    def ref(x, p):
        cd = jnp.bfloat16
        h1 = jnp.dot(x.astype(cd), p["w1"].astype(cd),
                     preferred_element_type=jnp.float32) + p["b1"]
        h1 = jnp.maximum(h1, 0.0).astype(cd)
        h2 = jnp.dot(h1, p["w2"].astype(cd),
                     preferred_element_type=jnp.float32) + p["b2"]
        h2 = jnp.maximum(h2, 0.0).astype(cd)
        return jnp.dot(h2, p["w3"].astype(cd),
                       preferred_element_type=jnp.float32) + p["b3"]

    expected = ref(x, params)
    assert out.shape == (batch, output_dim), out.shape
    assert jnp.allclose(out, expected, atol=5e-3, rtol=5e-3), (
        float(jnp.max(jnp.abs(out - expected))))

    # Also sanity-check against full-f32 math (bf16 rounding tolerance).
    def ref_f32(x, p):
        h1 = jnp.maximum(x @ p["w1"] + p["b1"], 0.0)
        h2 = jnp.maximum(h1 @ p["w2"] + p["b2"], 0.0)
        return h2 @ p["w3"] + p["b3"]

    assert jnp.allclose(out, ref_f32(x, params), atol=5e-2, rtol=5e-2)

    print("KERNEL_OK")
</pallas_src>

<mosaic_0001>
module attributes {stable_mosaic.version = 11 : i64} {
  func.func @mlp_kernel(%arg0: i32, %arg1: memref<16x16xf32, #tpu.memory_space<vmem>>, %arg2: memref<16x128xbf16, #tpu.memory_space<vmem>>, %arg3: memref<1x128xf32, #tpu.memory_space<vmem>>, %arg4: memref<128x128xbf16, #tpu.memory_space<vmem>>, %arg5: memref<1x128xf32, #tpu.memory_space<vmem>>, %arg6: memref<128x8xbf16, #tpu.memory_space<vmem>>, %arg7: memref<1x8xf32, #tpu.memory_space<vmem>>, %arg8: memref<16x8xf32, #tpu.memory_space<vmem>>) attributes {dimension_semantics = [#tpu.dimension_semantics<parallel>], iteration_bounds = array<i64: 1>, scalar_prefetch = 0 : i64, scratch_operands = 0 : i64, tpu.core_type = #tpu.core_type<tc>, window_params = [{transform_indices = @transform_0, window_bounds = array<i64: 16, 16>}, {pipeline_mode = #tpu.pipeline_mode<synchronous>, transform_indices = @transform_1, window_bounds = array<i64: 16, 128>}, {pipeline_mode = #tpu.pipeline_mode<synchronous>, transform_indices = @transform_2, window_bounds = array<i64: 1, 128>}, {pipeline_mode = #tpu.pipeline_mode<synchronous>, transform_indices = @transform_3, window_bounds = array<i64: 128, 128>}, {pipeline_mode = #tpu.pipeline_mode<synchronous>, transform_indices = @transform_4, window_bounds = array<i64: 1, 128>}, {pipeline_mode = #tpu.pipeline_mode<synchronous>, transform_indices = @transform_5, window_bounds = array<i64: 128, 8>}, {pipeline_mode = #tpu.pipeline_mode<synchronous>, transform_indices = @transform_6, window_bounds = array<i64: 1, 8>}, {transform_indices = @transform_7, window_bounds = array<i64: 16, 8>}]} {
    %c0 = arith.constant 0 : index
    %c0_0 = arith.constant 0 : index
    %0 = vector.load %arg1[%c0, %c0_0] : memref<16x16xf32, #tpu.memory_space<vmem>>, vector<16x16xf32>
    %1 = arith.truncf %0 : vector<16x16xf32> to vector<16x16xbf16>
    %c0_1 = arith.constant 0 : index
    %c0_2 = arith.constant 0 : index
    %2 = vector.load %arg2[%c0_1, %c0_2] : memref<16x128xbf16, #tpu.memory_space<vmem>>, vector<16x128xbf16>
    %cst = arith.constant dense<0.000000e+00> : vector<16x128xf32>
    %3 = tpu.matmul %1, %2, %cst {dimension_numbers = #tpu.dot_dimension_numbers<[1], [0], [0], [1], [0, 0, 1, 1], [], []>} : vector<16x16xbf16>, vector<16x128xbf16>, vector<16x128xf32> -> vector<16x128xf32>
    %c0_3 = arith.constant 0 : index
    %c0_4 = arith.constant 0 : index
    %4 = vector.load %arg3[%c0_3, %c0_4] : memref<1x128xf32, #tpu.memory_space<vmem>>, vector<1x128xf32>
    %5 = vector.broadcast %4 : vector<1x128xf32> to vector<16x128xf32>
    %6 = arith.addf %3, %5 : vector<16x128xf32>
    %cst_5 = arith.constant 0.000000e+00 : f32
    %7 = vector.broadcast %cst_5 : f32 to vector<16x128xf32>
    %8 = arith.maximumf %6, %7 : vector<16x128xf32>
    %9 = arith.truncf %8 : vector<16x128xf32> to vector<16x128xbf16>
    %c0_6 = arith.constant 0 : index
    %c0_7 = arith.constant 0 : index
    %10 = vector.load %arg4[%c0_6, %c0_7] : memref<128x128xbf16, #tpu.memory_space<vmem>>, vector<128x128xbf16>
    %cst_8 = arith.constant dense<0.000000e+00> : vector<16x128xf32>
    %11 = tpu.matmul %9, %10, %cst_8 {dimension_numbers = #tpu.dot_dimension_numbers<[1], [0], [0], [1], [0, 0, 1, 1], [], []>} : vector<16x128xbf16>, vector<128x128xbf16>, vector<16x128xf32> -> vector<16x128xf32>
    %c0_9 = arith.constant 0 : index
    %c0_10 = arith.constant 0 : index
    %12 = vector.load %arg5[%c0_9, %c0_10] : memref<1x128xf32, #tpu.memory_space<vmem>>, vector<1x128xf32>
    %13 = vector.broadcast %12 : vector<1x128xf32> to vector<16x128xf32>
    %14 = arith.addf %11, %13 : vector<16x128xf32>
    %cst_11 = arith.constant 0.000000e+00 : f32
    %15 = vector.broadcast %cst_11 : f32 to vector<16x128xf32>
    %16 = arith.maximumf %14, %15 : vector<16x128xf32>
    %17 = arith.truncf %16 : vector<16x128xf32> to vector<16x128xbf16>
    %c0_12 = arith.constant 0 : index
    %c0_13 = arith.constant 0 : index
    %18 = vector.load %arg6[%c0_12, %c0_13] : memref<128x8xbf16, #tpu.memory_space<vmem>>, vector<128x8xbf16>
    %cst_14 = arith.constant dense<0.000000e+00> : vector<16x8xf32>
    %19 = tpu.matmul %17, %18, %cst_14 {dimension_numbers = #tpu.dot_dimension_numbers<[1], [0], [0], [1], [0, 0, 1, 1], [], []>} : vector<16x128xbf16>, vector<128x8xbf16>, vector<16x8xf32> -> vector<16x8xf32>
    %c0_15 = arith.constant 0 : index
    %c0_16 = arith.constant 0 : index
    %20 = vector.load %arg7[%c0_15, %c0_16] : memref<1x8xf32, #tpu.memory_space<vmem>>, vector<1x8xf32>
    %21 = vector.broadcast %20 : vector<1x8xf32> to vector<16x8xf32>
    %22 = arith.addf %19, %21 : vector<16x8xf32>
    %c0_17 = arith.constant 0 : index
    %c0_18 = arith.constant 0 : index
    %23 = vector.load %arg8[%c0_17, %c0_18] : memref<16x8xf32, #tpu.memory_space<vmem>>, vector<16x8xf32>
    tpu.vector_store %arg8[%c0_17, %c0_18], %22 {strides = array<i32>} : memref<16x8xf32, #tpu.memory_space<vmem>>, vector<16x8xf32>,
    return
  }
  func.func @transform_0(%arg0: i32) -> (i32, i32) {
    %c0_i32 = arith.constant 0 : i32
    %c0_i32_0 = arith.constant 0 : i32
    return %arg0, %c0_i32 : i32, i32
  }
  func.func @transform_1(%arg0: i32) -> (i32, i32) {
    %c0_i32 = arith.constant 0 : i32
    %c0_i32_0 = arith.constant 0 : i32
    %c0_i32_1 = arith.constant 0 : i32
    return %c0_i32, %c0_i32_0 : i32, i32
  }
  func.func @transform_2(%arg0: i32) -> (i32, i32) {
    %c0_i32 = arith.constant 0 : i32
    %c0_i32_0 = arith.constant 0 : i32
    %c0_i32_1 = arith.constant 0 : i32
    return %c0_i32, %c0_i32_0 : i32, i32
  }
  func.func @transform_3(%arg0: i32) -> (i32, i32) {
    %c0_i32 = arith.constant 0 : i32
    %c0_i32_0 = arith.constant 0 : i32
    %c0_i32_1 = arith.constant 0 : i32
    return %c0_i32, %c0_i32_0 : i32, i32
  }
  func.func @transform_4(%arg0: i32) -> (i32, i32) {
    %c0_i32 = arith.constant 0 : i32
    %c0_i32_0 = arith.constant 0 : i32
    %c0_i32_1 = arith.constant 0 : i32
    return %c0_i32, %c0_i32_0 : i32, i32
  }
  func.func @transform_5(%arg0: i32) -> (i32, i32) {
    %c0_i32 = arith.constant 0 : i32
    %c0_i32_0 = arith.constant 0 : i32
    %c0_i32_1 = arith.constant 0 : i32
    return %c0_i32, %c0_i32_0 : i32, i32
  }
  func.func @transform_6(%arg0: i32) -> (i32, i32) {
    %c0_i32 = arith.constant 0 : i32
    %c0_i32_0 = arith.constant 0 : i32
    %c0_i32_1 = arith.constant 0 : i32
    return %c0_i32, %c0_i32_0 : i32, i32
  }
  func.func @transform_7(%arg0: i32) -> (i32, i32) {
    %c0_i32 = arith.constant 0 : i32
    %c0_i32_0 = arith.constant 0 : i32
    return %arg0, %c0_i32 : i32, i32
  }
}

</mosaic_0001>

<llo_original>
// kernel: tpu_custom_call.1
$region0: #{tpu_custom_call.1}
  #allocation0 [shape = 'u32[]', space=smem, size = 0x4, offset = 0x4, fixed_abs, tag = 'smem constant byte address 0x4 - core index']
  #allocation1 [shape = 'u32[144,128]{1,0:T(1,128)}', space=vmem, size = 0x12000, scoped, tag = 'internal scratch']
  %s0 = inlined_call_operand.hbm [shape: f32[16,16], index: 0, kind: input, shape index: {}]
  %s1 = inlined_call_operand.vmem [shape: bf16[16,128], index: 1, kind: input, shape index: {}]
  %s2 = inlined_call_operand.vmem [shape: f32[1,128], index: 2, kind: input, shape index: {}]
  %s3 = inlined_call_operand.vmem [shape: bf16[128,128], index: 3, kind: input, shape index: {}]
  %s4 = inlined_call_operand.hbm [shape: f32[1,128], index: 4, kind: input, shape index: {}]
  %s5 = inlined_call_operand.vmem [shape: bf16[128,8], index: 5, kind: input, shape index: {}]
  %s6 = inlined_call_operand.vmem [shape: f32[1,8], index: 6, kind: input, shape index: {}]
  %s7 = inlined_call_operand.vmem [shape: f32[16,8], index: 7, kind: output, shape index: {}]
  %s8 = sld [smem:[#allocation0]]
  $region46: #{tpu_custom_call.1} parent=0
    _
  %s10 = ssub.s32 1, %s8
  %s11 = scalar_select 0, %s10, %s8
  $region1: #{tpu_custom_call.1} parent=0
    #allocation2 [shape = 'u8[8192]{0}', space=vmem, size = 0x2000, scoped, tag = 'input window, operand 0, single buffered']
    #allocation3 [shape = 's32[1]{0}', space=sflag, size = 0x4, scoped, tag = 'scoped memory for tpu_custom_call.1']
    #allocation4 [shape = 'u8[512]{0}', space=vmem, size = 0x400, scoped, tag = 'input window, operand 4, single buffered']
    #allocation5 [shape = 's32[1]{0}', space=sflag, size = 0x4, scoped, tag = 'scoped memory for tpu_custom_call.1']
    %12 = vsyncpa [#allocation3], 0
    %13 = vsyncpa [#allocation5], 0
    // Predicated region
    $region2: #{tpu_custom_call.1} parent=1 // pred_check
      _
    $region3: #{tpu_custom_call.1} parent=1 // pred_check_branch
      %15 = sbr.rel (0) target = $region5
    $region4: #{tpu_custom_call.1} parent=1 // pred_region
      %s17 = ssub.s32 256, 256
      %18 = vsyncadd [#allocation3], %s17
      %s19 = sshll.u32 [#allocation2], 4
      %s20 = int_to_ptr.vmem [resolvable:$true] %s19
      %25 = dma.hbm_to_vmem [thread:$0]  %s0, 256, %s20, [#allocation3], 128, 128, 8
    $region5: #{tpu_custom_call.1} parent=1 // pred_fallthru
      _
    // Predicated region
    $region6: #{tpu_custom_call.1} parent=1 // pred_check
      _
    $region7: #{tpu_custom_call.1} parent=1 // pred_check_branch
      %27 = sbr.rel (0) target = $region9
    $region8: #{tpu_custom_call.1} parent=1 // pred_region
      _
    $region9: #{tpu_custom_call.1} parent=1 // pred_fallthru
      _
    // Predicated region
    $region10: #{tpu_custom_call.1} parent=1 // pred_check
      _
    $region11: #{tpu_custom_call.1} parent=1 // pred_check_branch
      %29 = sbr.rel (0) target = $region13
    $region12: #{tpu_custom_call.1} parent=1 // pred_region
      _
    $region13: #{tpu_custom_call.1} parent=1 // pred_fallthru
      _
    // Predicated region
    $region14: #{tpu_custom_call.1} parent=1 // pred_check
      _
    $region15: #{tpu_custom_call.1} parent=1 // pred_check_branch
      %31 = sbr.rel (0) target = $region17
    $region16: #{tpu_custom_call.1} parent=1 // pred_region
      _
    $region17: #{tpu_custom_call.1} parent=1 // pred_fallthru
      _
    // Predicated region
    $region18: #{tpu_custom_call.1} parent=1 // pred_check
      _
    $region19: #{tpu_custom_call.1} parent=1 // pred_check_branch
      %33 = sbr.rel (0) target = $region21
    $region20: #{tpu_custom_call.1} parent=1 // pred_region
      %s35 = ssub.s32 16, 16
      %36 = vsyncadd [#allocation5], %s35
      %s38 = sshll.u32 [#allocation4], 4
      %s39 = int_to_ptr.vmem [resolvable:$true] %s38
      %41 = dma.hbm_to_vmem [thread:$0]  %s4, 16, %s39, [#allocation5]
    $region21: #{tpu_custom_call.1} parent=1 // pred_fallthru
      _
    // Predicated region
    $region22: #{tpu_custom_call.1} parent=1 // pred_check
      _
    $region23: #{tpu_custom_call.1} parent=1 // pred_check_branch
      %43 = sbr.rel (0) target = $region25
    $region24: #{tpu_custom_call.1} parent=1 // pred_region
      _
    $region25: #{tpu_custom_call.1} parent=1 // pred_fallthru
      _
    // Predicated region
    $region26: #{tpu_custom_call.1} parent=1 // pred_check
      _
    $region27: #{tpu_custom_call.1} parent=1 // pred_check_branch
      %45 = sbr.rel (0) target = $region29
    $region28: #{tpu_custom_call.1} parent=1 // pred_region
      _
    $region29: #{tpu_custom_call.1} parent=1 // pred_fallthru
      _
    // Predicated region
    $region30: #{tpu_custom_call.1} parent=1 // pred_check
      _
    $region31: #{tpu_custom_call.1} parent=1 // pred_check_branch
      %47 = sbr.rel (0) target = $region33
    $region32: #{tpu_custom_call.1} parent=1 // pred_region
      %48 = dma.done [#allocation3], 256
    $region33: #{tpu_custom_call.1} parent=1 // pred_fallthru
      _
    // Predicated region
    $region34: #{tpu_custom_call.1} parent=1 // pred_check
      _
    $region35: #{tpu_custom_call.1} parent=1 // pred_check_branch
      %50 = sbr.rel (0) target = $region37
    $region36: #{tpu_custom_call.1} parent=1 // pred_region
      %51 = dma.done [#allocation5], 16
    $region37: #{tpu_custom_call.1} parent=1 // pred_fallthru
      _
    %v53 = vld [vmem:[#allocation2] sm:$0xff]
    %v54 = vld [vmem:[#allocation2 + $0x8] sm:$0xff]
    %v55 = vpack.c.bf16 %v54, %v53
    %v56 = vld [vmem:[%s1] sm:$0xf]
    %v57 = vld [vmem:[%s1 + $0x4] sm:$0xf]
    %v58 = vld [vmem:[%s2] sm:$0x1]
    %v60 = vlaneseq
    %v61 = vshrl.u32 %v60, 7
    %v62 = vsub.s32 0, %v61
    %v63 = vrot.slane %v58, %v62
    %v67 = vunpack.c.l.b16 %v56
    %v68 = vunpack.c.l.b16 %v57
    %v69 = vpack.c.b16 %v68, %v67
    %vm71 = vcmask 130048
    %v73 = vsel %vm71, %v55, 0
    %75 = vmatprep.subr.bf16.mxu0 0
    %76 = vmatpush1.bf16.msra.mxu0 0
    %77 = vmatprep.subr.bf16.mxu0 0
    %78 = vmatpush1.bf16.msra.mxu0 0
    %79 = vmatprep.subr.bf16.mxu0 0
    %80 = vmatpush1.bf16.msra.mxu0 0
    %81 = vmatprep.subr.bf16.mxu0 0
    %82 = vmatpush1.bf16.msra.mxu0 0
    %83 = vmatprep.subr.bf16.mxu0 0
    %84 = vmatpush1.bf16.msra.mxu0 0
    %85 = vmatprep.subr.bf16.mxu0 0
    %86 = vmatpush1.bf16.msra.mxu0 0
    %87 = vmatprep.subr.bf16.mxu0 0
    %88 = vmatpush1.bf16.msra.mxu0 0
    %89 = vmatprep.subr.bf16.mxu0 0
    %90 = vmatpush1.bf16.msra.mxu0 %v69
    %91 = vmatprep.subr.bf16.mxu0 0
    %92 = vmatpush2.bf16.msra.mxu0 0
    %93 = vmatprep.subr.bf16.mxu0 0
    %94 = vmatpush2.bf16.msra.mxu0 0
    %95 = vmatprep.subr.bf16.mxu0 0
    %96 = vmatpush2.bf16.msra.mxu0 0
    %97 = vmatprep.subr.bf16.mxu0 0
    %98 = vmatpush2.bf16.msra.mxu0 0
    %99 = vmatprep.subr.bf16.mxu0 0
    %100 = vmatpush2.bf16.msra.mxu0 0
    %101 = vmatprep.subr.bf16.mxu0 0
    %102 = vmatpush2.bf16.msra.mxu0 0
    %103 = vmatprep.subr.bf16.mxu0 0
    %104 = vmatpush2.bf16.msra.mxu0 0
    %105 = vmatprep.subr.bf16.mxu0 0
    %106 = vmatpush2.bf16.msra.mxu0 0
    %107 = vmatprep.mubr.bf16.mxu0 0
    %108 = vmatmul.mubr.bf16.gmra.mxu0 %v73
    %v109 = vpop.f32.mrf.mxu0
    %v110 = vadd.f32 %v63, %v109
    %v111 = vpop.f32.mrf.mxu0
    %v112 = vpop.f32.mrf.mxu0
    %v113 = vadd.f32 %v63, %v112
    %v114 = vpop.f32.mrf.mxu0
    %115 = vdwg.mxu0
    %v116 = vmax.f32 %v110, 0.0
    %v117 = vmax.f32 %v113, 0.0
    %v118 = vpack.c.bf16 %v117, %v116
    %v119 = vld [vmem:[%s3] sm:$0xf]
    %v120 = vld [vmem:[%s3 + $0x4] sm:$0xf]
    %v121 = vld [vmem:[%s3 + $0x8] sm:$0xf]
    %v122 = vld [vmem:[%s3 + $0xc] sm:$0xf]
    %v123 = vld [vmem:[%s3 + $0x10] sm:$0xf]
    %v124 = vld [vmem:[%s3 + $0x14] sm:$0xf]
    %v125 = vld [vmem:[%s3 + $0x18] sm:$0xf]
    %v126 = vld [vmem:[%s3 + $0x1c] sm:$0xf]
    %v127 = vld [vmem:[%s3 + $0x20] sm:$0xf]
    %v128 = vld [vmem:[%s3 + $0x24] sm:$0xf]
    %v129 = vld [vmem:[%s3 + $0x28] sm:$0xf]
    %v130 = vld [vmem:[%s3 + $0x2c] sm:$0xf]
    %v131 = vld [vmem:[%s3 + $0x30] sm:$0xf]
    %v132 = vld [vmem:[%s3 + $0x34] sm:$0xf]
    %v133 = vld [vmem:[%s3 + $0x38] sm:$0xf]
    %v134 = vld [vmem:[%s3 + $0x3c] sm:$0xf]
    %v135 = vld [vmem:[#allocation4] sm:$0x1]
    %v137 = vlaneseq
    %v138 = vshrl.u32 %v137, 7
    %v139 = vsub.s32 0, %v138
    %v140 = vrot.slane %v135, %v139
    %v158 = vunpack.c.l.b16 %v119
    %v159 = vunpack.c.l.b16 %v120
    %v160 = vunpack.c.l.b16 %v121
    %v161 = vunpack.c.l.b16 %v122
    %v162 = vunpack.c.l.b16 %v123
    %v163 = vunpack.c.l.b16 %v124
    %v164 = vunpack.c.l.b16 %v125
    %v165 = vunpack.c.l.b16 %v126
    %v166 = vunpack.c.l.b16 %v127
    %v167 = vunpack.c.l.b16 %v128
    %v168 = vunpack.c.l.b16 %v129
    %v169 = vunpack.c.l.b16 %v130
    %v170 = vunpack.c.l.b16 %v131
    %v171 = vunpack.c.l.b16 %v132
    %v172 = vunpack.c.l.b16 %v133
    %v173 = vunpack.c.l.b16 %v134
    %v174 = vpack.c.b16 %v159, %v158
    %v175 = vpack.c.b16 %v161, %v160
    %v176 = vpack.c.b16 %v163, %v162
    %v177 = vpack.c.b16 %v165, %v164
    %v178 = vpack.c.b16 %v167, %v166
    %v179 = vpack.c.b16 %v169, %v168
    %v180 = vpack.c.b16 %v171, %v170
    %v181 = vpack.c.b16 %v173, %v172
    %190 = vmatprep.subr.bf16.mxu0 0
    %191 = vmatpush1.bf16.msra.mxu0 %v181
    %192 = vmatprep.subr.bf16.mxu0 0
    %193 = vmatpush1.bf16.msra.mxu0 %v180
    %194 = vmatprep.subr.bf16.mxu0 0
    %195 = vmatpush1.bf16.msra.mxu0 %v179
    %196 = vmatprep.subr.bf16.mxu0 0
    %197 = vmatpush1.bf16.msra.mxu0 %v178
    %198 = vmatprep.subr.bf16.mxu0 0
    %199 = vmatpush1.bf16.msra.mxu0 %v177
    %200 = vmatprep.subr.bf16.mxu0 0
    %201 = vmatpush1.bf16.msra.mxu0 %v176
    %202 = vmatprep.subr.bf16.mxu0 0
    %203 = vmatpush1.bf16.msra.mxu0 %v175
    %204 = vmatprep.subr.bf16.mxu0 0
    %205 = vmatpush1.bf16.msra.mxu0 %v174
    %206 = vmatprep.subr.bf16.mxu0 0
    %207 = vmatpush2.bf16.msra.mxu0 0
    %208 = vmatprep.subr.bf16.mxu0 0
    %209 = vmatpush2.bf16.msra.mxu0 0
    %210 = vmatprep.subr.bf16.mxu0 0
    %211 = vmatpush2.bf16.msra.mxu0 0
    %212 = vmatprep.subr.bf16.mxu0 0
    %213 = vmatpush2.bf16.msra.mxu0 0
    %214 = vmatprep.subr.bf16.mxu0 0
    %215 = vmatpush2.bf16.msra.mxu0 0
    %216 = vmatprep.subr.bf16.mxu0 0
    %217 = vmatpush2.bf16.msra.mxu0 0
    %218 = vmatprep.subr.bf16.mxu0 0
    %219 = vmatpush2.bf16.msra.mxu0 0
    %220 = vmatprep.subr.bf16.mxu0 0
    %221 = vmatpush2.bf16.msra.mxu0 0
    %222 = vmatprep.mubr.bf16.mxu0 0
    %223 = vmatmul.mubr.bf16.gmra.mxu0 %v118
    %v224 = vpop.f32.mrf.mxu0
    %v225 = vadd.f32 %v140, %v224
    %v226 = vpop.f32.mrf.mxu0
    %v227 = vpop.f32.mrf.mxu0
    %v228 = vadd.f32 %v140, %v227
    %v229 = vpop.f32.mrf.mxu0
    %230 = vdwg.mxu0
    %v231 = vmax.f32 %v225, 0.0
    %v232 = vmax.f32 %v228, 0.0
    %v233 = vpack.c.bf16 %v232, %v231
    %v234 = vld [vmem:[%s5] sm:$0xf]
    %v235 = vld [vmem:[%s5 + $0x4] sm:$0xf]
    %v236 = vld [vmem:[%s5 + $0x8] sm:$0xf]
    %v237 = vld [vmem:[%s5 + $0xc] sm:$0xf]
    %v238 = vld [vmem:[%s5 + $0x10] sm:$0xf]
    %v239 = vld [vmem:[%s5 + $0x14] sm:$0xf]
    %v240 = vld [vmem:[%s5 + $0x18] sm:$0xf]
    %v241 = vld [vmem:[%s5 + $0x1c] sm:$0xf]
    %v242 = vld [vmem:[%s5 + $0x20] sm:$0xf]
    %v243 = vld [vmem:[%s5 + $0x24] sm:$0xf]
    %v244 = vld [vmem:[%s5 + $0x28] sm:$0xf]
    %v245 = vld [vmem:[%s5 + $0x2c] sm:$0xf]
    %v246 = vld [vmem:[%s5 + $0x30] sm:$0xf]
    %v247 = vld [vmem:[%s5 + $0x34] sm:$0xf]
    %v248 = vld [vmem:[%s5 + $0x38] sm:$0xf]
    %v249 = vld [vmem:[%s5 + $0x3c] sm:$0xf]
    %v250 = vld [vmem:[%s6] sm:$0x1]
    %v252 = vlaneseq
    %v253 = vshrl.u32 %v252, 7
    %v254 = vsub.s32 0, %v253
    %v255 = vrot.slane %v250, %v254
    %v273 = vunpack.c.l.b16 %v234
    %v274 = vunpack.c.l.b16 %v235
    %v275 = vunpack.c.l.b16 %v236
    %v276 = vunpack.c.l.b16 %v237
    %v277 = vunpack.c.l.b16 %v238
    %v278 = vunpack.c.l.b16 %v239
    %v279 = vunpack.c.l.b16 %v240
    %v280 = vunpack.c.l.b16 %v241
    %v281 = vunpack.c.l.b16 %v242
    %v282 = vunpack.c.l.b16 %v243
    %v283 = vunpack.c.l.b16 %v244
    %v284 = vunpack.c.l.b16 %v245
    %v285 = vunpack.c.l.b16 %v246
    %v286 = vunpack.c.l.b16 %v247
    %v287 = vunpack.c.l.b16 %v248
    %v288 = vunpack.c.l.b16 %v249
    %v289 = vpack.c.b16 %v274, %v273
    %v290 = vpack.c.b16 %v276, %v275
    %v291 = vpack.c.b16 %v278, %v277
    %v292 = vpack.c.b16 %v280, %v279
    %v293 = vpack.c.b16 %v282, %v281
    %v294 = vpack.c.b16 %v284, %v283
    %v295 = vpack.c.b16 %v286, %v285
    %v296 = vpack.c.b16 %v288, %v287
    %305 = vmatprep.subr.bf16.mxu0 0
    %306 = vmatpush1.bf16.msra.mxu0 %v296
    %307 = vmatprep.subr.bf16.mxu0 0
    %308 = vmatpush1.bf16.msra.mxu0 %v295
    %309 = vmatprep.subr.bf16.mxu0 0
    %310 = vmatpush1.bf16.msra.mxu0 %v294
    %311 = vmatprep.subr.bf16.mxu0 0
    %312 = vmatpush1.bf16.msra.mxu0 %v293
    %313 = vmatprep.subr.bf16.mxu0 0
    %314 = vmatpush1.bf16.msra.mxu0 %v292
    %315 = vmatprep.subr.bf16.mxu0 0
    %316 = vmatpush1.bf16.msra.mxu0 %v291
    %317 = vmatprep.subr.bf16.mxu0 0
    %318 = vmatpush1.bf16.msra.mxu0 %v290
    %319 = vmatprep.subr.bf16.mxu0 0
    %320 = vmatpush1.bf16.msra.mxu0 %v289
    %321 = vmatprep.subr.bf16.mxu0 0
    %322 = vmatpush2.bf16.msra.mxu0 0
    %323 = vmatprep.subr.bf16.mxu0 0
    %324 = vmatpush2.bf16.msra.mxu0 0
    %325 = vmatprep.subr.bf16.mxu0 0
    %326 = vmatpush2.bf16.msra.mxu0 0
    %327 = vmatprep.subr.bf16.mxu0 0
    %328 = vmatpush2.bf16.msra.mxu0 0
    %329 = vmatprep.subr.bf16.mxu0 0
    %330 = vmatpush2.bf16.msra.mxu0 0
    %331 = vmatprep.subr.bf16.mxu0 0
    %332 = vmatpush2.bf16.msra.mxu0 0
    %333 = vmatprep.subr.bf16.mxu0 0
    %334 = vmatpush2.bf16.msra.mxu0 0
    %335 = vmatprep.subr.bf16.mxu0 0
    %336 = vmatpush2.bf16.msra.mxu0 0
    %337 = vmatprep.mubr.bf16.mxu0 0
    %338 = vmatmul.mubr.bf16.gmra.mxu0 %v233
    %v339 = vpop.f32.mrf.mxu0
    %v340 = vadd.f32 %v255, %v339
    %v341 = vpop.f32.mrf.mxu0
    %v342 = vpop.f32.mrf.mxu0
    %v343 = vadd.f32 %v255, %v342
    %v344 = vpop.f32.mrf.mxu0
    %345 = vdwg.mxu0
    %vm346 = vcmask 64512
    %347 = vst.msk [vmem:[%s7] sm:$0xff] %vm346, %v340
    %348 = vst.msk [vmem:[%s7 + $0x8] sm:$0xff] %vm346, %v343
    // Predicated region
    $region38: #{tpu_custom_call.1} parent=1 // pred_check
      _
    $region39: #{tpu_custom_call.1} parent=1 // pred_check_branch
      %350 = sbr.rel (0) target = $region41
    $region40: #{tpu_custom_call.1} parent=1 // pred_region
      _
    $region41: #{tpu_custom_call.1} parent=1 // pred_fallthru
      _
    // Predicated region
    $region42: #{tpu_custom_call.1} parent=1 // pred_check
      _
    $region43: #{tpu_custom_call.1} parent=1 // pred_check_branch
      %352 = sbr.rel (0) target = $region45
    $region44: #{tpu_custom_call.1} parent=1 // pred_region
      _
    $region45: #{tpu_custom_call.1} parent=1 // pred_fallthru
      _
    %353 = vsyncpa [#allocation3], 1
    %354 = vsyncpa [#allocation5], 1

</llo_original>
